<compile_context>
chip_gen: v6e
topology: v6e:2x2x1
jax: 0.10.0
libtpu: 0.0.40
codegen_flags: <defaults>
</compile_context>

<pallas_src>
import functools

import jax
import jax.numpy as jnp
import numpy as np
from jax.experimental import pallas as pl
from jax.experimental.pallas import tpu as pltpu


def _round_up(x, m):
    return (x + m - 1) // m * m


def umlp_kernel(x_ref, wd_ref, bd_ref, wu_ref, bu_ref, wp_ref, s_ref, o_ref):
    """One batch tile of the UMLP forward.

    x_ref  : [TB, in_dim]        f32   (streamed per grid step)
    wd_ref : [in_dim, latent]    bf16  (resident)    bd_ref : [1, latent]  f32
    wu_ref : [latent, in_dim]    bf16  (resident)    bu_ref : [1, in_dim]  f32
    wp_ref : [in_dim, out_pad]   bf16  (resident, zero-padded columns)
    s_ref  : [in_dim, out_pad]   f32   one-hot nearest-interp scatter (resident)
    o_ref  : [TB, out_pad]             (streamed per grid step, lane-dense)
    """
    x = x_ref[...].astype(jnp.float32)

    # f1 = down(relu(x)) -- bf16 MXU inputs, f32 accumulation, f32 bias add (VPU).
    a0 = jnp.maximum(x, 0.0).astype(jnp.bfloat16)
    f1 = jnp.dot(a0, wd_ref[...], preferred_element_type=jnp.float32) + bd_ref[...]

    # f2 = up(relu(f1))
    a1 = jnp.maximum(f1, 0.0).astype(jnp.bfloat16)
    f2 = jnp.dot(a1, wu_ref[...], preferred_element_type=jnp.float32) + bu_ref[...]

    # projection(f2)
    proj = jnp.dot(f2.astype(jnp.bfloat16), wp_ref[...],
                   preferred_element_type=jnp.float32)

    # Nearest-neighbour residual fused as an f32 one-hot matmul (keeps the skip path in
    # f32 and avoids a second HBM read of the activations).
    res = jnp.dot(x, s_ref[...], preferred_element_type=jnp.float32)

    o_ref[...] = (proj + res).astype(o_ref.dtype)


@functools.partial(jax.jit, static_argnames=("out_dim", "block_b"))
def umlp_forward(x, w_down, b_down, w_up, b_up, w_proj, out_dim, block_b=128):
    B, in_dim = x.shape
    latent_dim = w_down.shape[1]

    out_pad = _round_up(out_dim, 128)                 # lane-dense output stores
    TB = min(_round_up(block_b, 8), _round_up(B, 8))  # sublane-aligned batch tile
    nb = pl.cdiv(B, TB)

    # bf16 weights feed the MXU at peak and halve resident VMEM; biases stay f32.
    wd = w_down.astype(jnp.bfloat16)
    wu = w_up.astype(jnp.bfloat16)
    wp = jnp.pad(w_proj, ((0, 0), (0, out_pad - out_dim))).astype(jnp.bfloat16)
    bd2 = b_down.reshape(1, latent_dim).astype(jnp.float32)
    bu2 = b_up.reshape(1, in_dim).astype(jnp.float32)

    # Static nearest-neighbour index (matches F.interpolate(mode='nearest')) folded
    # into a one-hot scatter matrix; handles in_dim == out_dim (identity) uniformly.
    idx = np.floor(np.arange(out_dim) * (in_dim / out_dim)).astype(np.int32)
    s = jnp.zeros((in_dim, out_pad), jnp.float32).at[idx, np.arange(out_dim)].set(1.0)

    # VMEM budget: resident weights + double-buffered streamed tiles, with headroom,
    # capped at 64 MiB so it is also legal on v7x's 64 MiB/TC VMEM.
    resident = (wd.size + wu.size + wp.size) * 2 + (s.size + bd2.size + bu2.size) * 4
    streamed = TB * in_dim * x.dtype.itemsize + TB * out_pad * x.dtype.itemsize
    need = 2 * resident + 2 * streamed
    vmem_limit = int(min(max(2 * need, 32 * 1024 * 1024), 64 * 1024 * 1024))

    def resident_spec(shape):
        return pl.BlockSpec(shape, lambda i, _r=len(shape): (0,) * _r)

    out = pl.pallas_call(
        umlp_kernel,
        out_shape=jax.ShapeDtypeStruct((B, out_pad), x.dtype),
        grid=(nb,),
        in_specs=[
            pl.BlockSpec((TB, in_dim), lambda i: (i, 0)),   # x       (streamed)
            resident_spec((in_dim, latent_dim)),            # w_down  (resident)
            resident_spec((1, latent_dim)),                 # b_down
            resident_spec((latent_dim, in_dim)),            # w_up
            resident_spec((1, in_dim)),                     # b_up
            resident_spec((in_dim, out_pad)),               # w_proj  (padded)
            resident_spec((in_dim, out_pad)),               # scatter S
        ],
        out_specs=pl.BlockSpec((TB, out_pad), lambda i: (i, 0)),
        compiler_params=pltpu.CompilerParams(
            dimension_semantics=("parallel",),
            vmem_limit_bytes=vmem_limit,
        ),
    )(x, wd, bd2, wu, bu2, wp, s)

    return out[:, :out_dim] if out_pad != out_dim else out


def make_params(key, in_dim, latent_dim, out_dim, dtype=jnp.float32):
    """Deterministic synthetic init (matches nn.Linear shapes; projection zeroed)."""
    k1, k2, k3, k4 = jax.random.split(key, 4)
    s_d = 1.0 / jnp.sqrt(in_dim)
    s_u = 1.0 / jnp.sqrt(latent_dim)
    # Stored already transposed to [in, out] relative to torch's [out, in].
    w_down = jax.random.uniform(k1, (in_dim, latent_dim), dtype, -s_d, s_d)
    b_down = jax.random.uniform(k2, (latent_dim,), dtype, -s_d, s_d)
    w_up = jax.random.uniform(k3, (latent_dim, in_dim), dtype, -s_u, s_u)
    b_up = jax.random.uniform(k4, (in_dim,), dtype, -s_u, s_u)
    w_proj = jnp.zeros((in_dim, out_dim), dtype)  # __zero_initial
    return w_down, b_down, w_up, b_up, w_proj


def umlp_reference(x, w_down, b_down, w_up, b_up, w_proj, out_dim):
    """Pure-JAX f32 reference mirroring the PyTorch forward."""
    f1 = jnp.maximum(x, 0.0) @ w_down + b_down
    f2 = jnp.maximum(f1, 0.0) @ w_up + b_up
    B, in_dim = x.shape
    if in_dim == out_dim:
        res = x
    else:
        idx = jnp.floor(
            jnp.arange(out_dim, dtype=jnp.float32) * (in_dim / out_dim)
        ).astype(jnp.int32)
        res = x[:, idx]
    return f2 @ w_proj + res


if __name__ == "__main__":
    # Small shapes; out_dim != in_dim exercises the nearest-interp path,
    # B / TB = 4 grid steps exercise the batch pipeline.
    B, in_dim, latent_dim, out_dim = 128, 32, 16, 48
    TB = 32

    key = jax.random.PRNGKey(0)
    kx, kp, kq = jax.random.split(key, 3)
    x = jax.random.normal(kx, (B, in_dim), jnp.float32)
    w_down, b_down, w_up, b_up, w_proj0 = make_params(kp, in_dim, latent_dim, out_dim)

    # (1) Module as constructed: zero-init projection -> output == nearest-interp residual
    #     (exact, since the skip path stays f32 inside the kernel).
    out0 = jax.block_until_ready(
        umlp_forward(x, w_down, b_down, w_up, b_up, w_proj0, out_dim=out_dim, block_b=TB))
    ref0 = umlp_reference(x, w_down, b_down, w_up, b_up, w_proj0, out_dim)
    assert out0.shape == (B, out_dim), out0.shape
    assert jnp.allclose(out0, ref0, atol=1e-2, rtol=1e-2), "mismatch vs reference (zero proj)"

    # (2) Trained-like nonzero projection -> exercises the bf16 MXU path end to end.
    s_p = 1.0 / jnp.sqrt(in_dim)
    w_proj1 = jax.random.uniform(kq, (in_dim, out_dim), jnp.float32, -s_p, s_p)
    out1 = jax.block_until_ready(
        umlp_forward(x, w_down, b_down, w_up, b_up, w_proj1, out_dim=out_dim, block_b=TB))
    ref1 = umlp_reference(x, w_down, b_down, w_up, b_up, w_proj1, out_dim)
    assert jnp.allclose(out1, ref1, atol=5e-2, rtol=5e-2), "mismatch vs reference (random proj)"

    print("KERNEL_OK")
</pallas_src>

<mosaic_0001>
module attributes {stable_mosaic.version = 11 : i64} {
  func.func @umlp_kernel(%arg0: i32, %arg1: memref<32x32xf32, #tpu.memory_space<vmem>>, %arg2: memref<32x16xbf16, #tpu.memory_space<vmem>>, %arg3: memref<1x16xf32, #tpu.memory_space<vmem>>, %arg4: memref<16x32xbf16, #tpu.memory_space<vmem>>, %arg5: memref<1x32xf32, #tpu.memory_space<vmem>>, %arg6: memref<32x128xbf16, #tpu.memory_space<vmem>>, %arg7: memref<32x128xf32, #tpu.memory_space<vmem>>, %arg8: memref<32x128xf32, #tpu.memory_space<vmem>>) attributes {dimension_semantics = [#tpu.dimension_semantics<parallel>], iteration_bounds = array<i64: 4>, scalar_prefetch = 0 : i64, scratch_operands = 0 : i64, tpu.core_type = #tpu.core_type<tc>, window_params = [{transform_indices = @transform_0, window_bounds = array<i64: 32, 32>}, {pipeline_mode = #tpu.pipeline_mode<synchronous>, transform_indices = @transform_1, window_bounds = array<i64: 32, 16>}, {pipeline_mode = #tpu.pipeline_mode<synchronous>, transform_indices = @transform_2, window_bounds = array<i64: 1, 16>}, {pipeline_mode = #tpu.pipeline_mode<synchronous>, transform_indices = @transform_3, window_bounds = array<i64: 16, 32>}, {pipeline_mode = #tpu.pipeline_mode<synchronous>, transform_indices = @transform_4, window_bounds = array<i64: 1, 32>}, {pipeline_mode = #tpu.pipeline_mode<synchronous>, transform_indices = @transform_5, window_bounds = array<i64: 32, 128>}, {pipeline_mode = #tpu.pipeline_mode<synchronous>, transform_indices = @transform_6, window_bounds = array<i64: 32, 128>}, {transform_indices = @transform_7, window_bounds = array<i64: 32, 128>}]} {
    %c0 = arith.constant 0 : index
    %c0_0 = arith.constant 0 : index
    %0 = vector.load %arg1[%c0, %c0_0] : memref<32x32xf32, #tpu.memory_space<vmem>>, vector<32x32xf32>
    %cst = arith.constant 0.000000e+00 : f32
    %1 = vector.broadcast %cst : f32 to vector<32x32xf32>
    %2 = arith.maximumf %0, %1 : vector<32x32xf32>
    %3 = arith.truncf %2 : vector<32x32xf32> to vector<32x32xbf16>
    %c0_1 = arith.constant 0 : index
    %c0_2 = arith.constant 0 : index
    %4 = vector.load %arg2[%c0_1, %c0_2] : memref<32x16xbf16, #tpu.memory_space<vmem>>, vector<32x16xbf16>
    %cst_3 = arith.constant dense<0.000000e+00> : vector<32x16xf32>
    %5 = tpu.matmul %3, %4, %cst_3 {dimension_numbers = #tpu.dot_dimension_numbers<[1], [0], [0], [1], [0, 0, 1, 1], [], []>} : vector<32x32xbf16>, vector<32x16xbf16>, vector<32x16xf32> -> vector<32x16xf32>
    %c0_4 = arith.constant 0 : index
    %c0_5 = arith.constant 0 : index
    %6 = vector.load %arg3[%c0_4, %c0_5] : memref<1x16xf32, #tpu.memory_space<vmem>>, vector<1x16xf32>
    %7 = vector.broadcast %6 : vector<1x16xf32> to vector<32x16xf32>
    %8 = arith.addf %5, %7 : vector<32x16xf32>
    %cst_6 = arith.constant 0.000000e+00 : f32
    %9 = vector.broadcast %cst_6 : f32 to vector<32x16xf32>
    %10 = arith.maximumf %8, %9 : vector<32x16xf32>
    %11 = arith.truncf %10 : vector<32x16xf32> to vector<32x16xbf16>
    %c0_7 = arith.constant 0 : index
    %c0_8 = arith.constant 0 : index
    %12 = vector.load %arg4[%c0_7, %c0_8] : memref<16x32xbf16, #tpu.memory_space<vmem>>, vector<16x32xbf16>
    %cst_9 = arith.constant dense<0.000000e+00> : vector<32x32xf32>
    %13 = tpu.matmul %11, %12, %cst_9 {dimension_numbers = #tpu.dot_dimension_numbers<[1], [0], [0], [1], [0, 0, 1, 1], [], []>} : vector<32x16xbf16>, vector<16x32xbf16>, vector<32x32xf32> -> vector<32x32xf32>
    %c0_10 = arith.constant 0 : index
    %c0_11 = arith.constant 0 : index
    %14 = vector.load %arg5[%c0_10, %c0_11] : memref<1x32xf32, #tpu.memory_space<vmem>>, vector<1x32xf32>
    %15 = vector.broadcast %14 : vector<1x32xf32> to vector<32x32xf32>
    %16 = arith.addf %13, %15 : vector<32x32xf32>
    %17 = arith.truncf %16 : vector<32x32xf32> to vector<32x32xbf16>
    %c0_12 = arith.constant 0 : index
    %c0_13 = arith.constant 0 : index
    %18 = vector.load %arg6[%c0_12, %c0_13] : memref<32x128xbf16, #tpu.memory_space<vmem>>, vector<32x128xbf16>
    %cst_14 = arith.constant dense<0.000000e+00> : vector<32x128xf32>
    %19 = tpu.matmul %17, %18, %cst_14 {dimension_numbers = #tpu.dot_dimension_numbers<[1], [0], [0], [1], [0, 0, 1, 1], [], []>} : vector<32x32xbf16>, vector<32x128xbf16>, vector<32x128xf32> -> vector<32x128xf32>
    %c0_15 = arith.constant 0 : index
    %c0_16 = arith.constant 0 : index
    %20 = vector.load %arg7[%c0_15, %c0_16] : memref<32x128xf32, #tpu.memory_space<vmem>>, vector<32x128xf32>
    %cst_17 = arith.constant dense<0.000000e+00> : vector<32x128xf32>
    %21 = tpu.matmul %0, %20, %cst_17 {dimension_numbers = #tpu.dot_dimension_numbers<[1], [0], [0], [1], [0, 0, 1, 1], [], []>} : vector<32x32xf32>, vector<32x128xf32>, vector<32x128xf32> -> vector<32x128xf32>
    %22 = arith.addf %19, %21 : vector<32x128xf32>
    %c0_18 = arith.constant 0 : index
    %c0_19 = arith.constant 0 : index
    %23 = vector.load %arg8[%c0_18, %c0_19] : memref<32x128xf32, #tpu.memory_space<vmem>>, vector<32x128xf32>
    tpu.vector_store %arg8[%c0_18, %c0_19], %22 {strides = array<i32>} : memref<32x128xf32, #tpu.memory_space<vmem>>, vector<32x128xf32>,
    return
  }
  func.func @transform_0(%arg0: i32) -> (i32, i32) {
    %c0_i32 = arith.constant 0 : i32
    %c0_i32_0 = arith.constant 0 : i32
    return %arg0, %c0_i32 : i32, i32
  }
  func.func @transform_1(%arg0: i32) -> (i32, i32) {
    %c0_i32 = arith.constant 0 : i32
    %c0_i32_0 = arith.constant 0 : i32
    %c0_i32_1 = arith.constant 0 : i32
    return %c0_i32, %c0_i32_0 : i32, i32
  }
  func.func @transform_2(%arg0: i32) -> (i32, i32) {
    %c0_i32 = arith.constant 0 : i32
    %c0_i32_0 = arith.constant 0 : i32
    %c0_i32_1 = arith.constant 0 : i32
    return %c0_i32, %c0_i32_0 : i32, i32
  }
  func.func @transform_3(%arg0: i32) -> (i32, i32) {
    %c0_i32 = arith.constant 0 : i32
    %c0_i32_0 = arith.constant 0 : i32
    %c0_i32_1 = arith.constant 0 : i32
    return %c0_i32, %c0_i32_0 : i32, i32
  }
  func.func @transform_4(%arg0: i32) -> (i32, i32) {
    %c0_i32 = arith.constant 0 : i32
    %c0_i32_0 = arith.constant 0 : i32
    %c0_i32_1 = arith.constant 0 : i32
    return %c0_i32, %c0_i32_0 : i32, i32
  }
  func.func @transform_5(%arg0: i32) -> (i32, i32) {
    %c0_i32 = arith.constant 0 : i32
    %c0_i32_0 = arith.constant 0 : i32
    %c0_i32_1 = arith.constant 0 : i32
    return %c0_i32, %c0_i32_0 : i32, i32
  }
  func.func @transform_6(%arg0: i32) -> (i32, i32) {
    %c0_i32 = arith.constant 0 : i32
    %c0_i32_0 = arith.constant 0 : i32
    %c0_i32_1 = arith.constant 0 : i32
    return %c0_i32, %c0_i32_0 : i32, i32
  }
  func.func @transform_7(%arg0: i32) -> (i32, i32) {
    %c0_i32 = arith.constant 0 : i32
    %c0_i32_0 = arith.constant 0 : i32
    return %arg0, %c0_i32 : i32, i32
  }
}

</mosaic_0001>

<llo_original>
// kernel: umlp_forward.1
$region0: #{umlp_forward.1}
  #allocation0 [shape = 'u32[]', space=smem, size = 0x4, offset = 0x4, fixed_abs, tag = 'smem constant byte address 0x4 - core index']
  #allocation1 [shape = 'u32[144,128]{1,0:T(1,128)}', space=vmem, size = 0x12000, scoped, tag = 'internal scratch']
  %s0 = inlined_call_operand.vmem [shape: f32[128,32], index: 0, kind: input, shape index: {}]
  %s1 = inlined_call_operand.vmem [shape: bf16[32,16], index: 1, kind: input, shape index: {}]
  %s2 = inlined_call_operand.vmem [shape: f32[1,16], index: 2, kind: input, shape index: {}]
  %s3 = inlined_call_operand.vmem [shape: bf16[16,32], index: 3, kind: input, shape index: {}]
  %s4 = inlined_call_operand.vmem [shape: f32[1,32], index: 4, kind: input, shape index: {}]
  %s5 = inlined_call_operand.vmem [shape: bf16[32,128], index: 5, kind: input, shape index: {}]
  %s6 = inlined_call_operand.vmem [shape: f32[32,128], index: 6, kind: input, shape index: {}]
  %s7 = inlined_call_operand.vmem [shape: f32[128,128], index: 7, kind: output, shape index: {}]
  %s8 = sld [smem:[#allocation0]]
  $region61: #{umlp_forward.1} parent=0
    _
  %s10 = ssub.s32 1, %s8
  %s11 = scalar_select 0, %s10, %s8
  loop: start=0, step=1, limit=6
  $region2: #{umlp_forward.1} parent=0 // loop_pre_header
    _
  $region3: #{umlp_forward.1} parent=0 // loop_header
    %s13 = sphi 0, %s17
    %p14 = scmp.ge.s32.totalorder %s13, 6
    %s23 = sphi 0, %s25
    %s26 = sphi 0, %s23
    %s27 = sphi 0, %s26
    %s43 = sphi 0, %s27
    %s47 = sphi 0, %s47
    %s49 = sphi 0, %s47
    %s50 = sphi 0, %s49
    %s64 = sphi 0, %s50
    %s68 = sphi 0, %s68
    %s70 = sphi 0, %s68
    %s71 = sphi 0, %s70
    %s85 = sphi 0, %s71
    %s89 = sphi 0, %s89
    %s91 = sphi 0, %s89
    %s92 = sphi 0, %s91
    %s106 = sphi 0, %s92
    %s110 = sphi 0, %s110
    %s112 = sphi 0, %s110
    %s113 = sphi 0, %s112
    %s127 = sphi 0, %s113
    %s131 = sphi 0, %s131
    %s133 = sphi 0, %s131
    %s134 = sphi 0, %s133
    %s148 = sphi 0, %s134
    %s152 = sphi 0, %s152
    %s154 = sphi 0, %s152
    %s155 = sphi 0, %s154
    %s169 = sphi 0, %s155
    %s175 = sphi 0, %s177
    %s178 = sphi 0, %s175
    %s179 = sphi 0, %s178
    %s195 = sphi 0, %s179
  $region4: #{umlp_forward.1} parent=0 // loop_header_branch
    %16 = sbr.rel (%p14) target = $region8
  $region5: #{umlp_forward.1} parent=0 // loop_body
    %s18 = ssub.s32 %s13, 1
    %s19 = ssub.s32 %s13, 2
    %s20 = sadd.s32 %s13, 1
    %s21 = ssub.s32 %s13, %s20
    %p22 = scmp.eq.s32.totalorder %s21, 0
    %s24 = sadd.s32 %s23, 1
    %s25 = scalar_select %p22, %s23, %s24
    %p28 = pneg %p22
    %p29 = scmp.eq.s32.totalorder %s13, 3
    %p30 = por %p28, %p29
    %p31 = scmp.ne.s32.totalorder %s23, %s26
    %p32 = scmp.eq.s32.totalorder %s13, 0
    %p33 = por %p31, %p32
    %p34 = scmp.ne.s32.totalorder %s23, %s26
    %p35 = scmp.eq.s32.totalorder %s18, 3
    %p36 = por %p34, %p35
    %p37 = scmp.ne.s32.totalorder %s26, %s27
    %p38 = scmp.eq.s32.totalorder %s18, 0
    %p39 = por %p37, %p38
    %p40 = scmp.ne.s32.totalorder %s26, %s27
    %p41 = scmp.eq.s32.totalorder %s19, 3
    %p42 = por %p40, %p41
    %p44 = scmp.ne.s32.totalorder %s27, %s43
    %p45 = scmp.eq.s32.totalorder %s19, 0
    %p46 = por %p44, %p45
    %s48 = sadd.s32 %s47, 1
    %p51 = scmp.eq.s32.totalorder %s13, 3
    %p52 = scmp.ne.s32.totalorder %s47, %s49
    %p53 = scmp.eq.s32.totalorder %s13, 0
    %p54 = por %p52, %p53
    %p55 = scmp.ne.s32.totalorder %s47, %s49
    %p56 = scmp.eq.s32.totalorder %s18, 3
    %p57 = por %p55, %p56
    %p58 = scmp.ne.s32.totalorder %s49, %s50
    %p59 = scmp.eq.s32.totalorder %s18, 0
    %p60 = por %p58, %p59
    %p61 = scmp.ne.s32.totalorder %s49, %s50
    %p62 = scmp.eq.s32.totalorder %s19, 3
    %p63 = por %p61, %p62
    %p65 = scmp.ne.s32.totalorder %s50, %s64
    %p66 = scmp.eq.s32.totalorder %s19, 0
    %p67 = por %p65, %p66
    %s69 = sadd.s32 %s68, 1
    %p72 = scmp.eq.s32.totalorder %s13, 3
    %p73 = scmp.ne.s32.totalorder %s68, %s70
    %p74 = scmp.eq.s32.totalorder %s13, 0
    %p75 = por %p73, %p74
    %p76 = scmp.ne.s32.totalorder %s68, %s70
    %p77 = scmp.eq.s32.totalorder %s18, 3
    %p78 = por %p76, %p77
    %p79 = scmp.ne.s32.totalorder %s70, %s71
    %p80 = scmp.eq.s32.totalorder %s18, 0
    %p81 = por %p79, %p80
    %p82 = scmp.ne.s32.totalorder %s70, %s71
    %p83 = scmp.eq.s32.totalorder %s19, 3
    %p84 = por %p82, %p83
    %p86 = scmp.ne.s32.totalorder %s71, %s85
    %p87 = scmp.eq.s32.totalorder %s19, 0
    %p88 = por %p86, %p87
    %s90 = sadd.s32 %s89, 1
    %p93 = scmp.eq.s32.totalorder %s13, 3
    %p94 = scmp.ne.s32.totalorder %s89, %s91
    %p95 = scmp.eq.s32.totalorder %s13, 0
    %p96 = por %p94, %p95
    %p97 = scmp.ne.s32.totalorder %s89, %s91
    %p98 = scmp.eq.s32.totalorder %s18, 3
    %p99 = por %p97, %p98
    %p100 = scmp.ne.s32.totalorder %s91, %s92
    %p101 = scmp.eq.s32.totalorder %s18, 0
    %p102 = por %p100, %p101
    %p103 = scmp.ne.s32.totalorder %s91, %s92
    %p104 = scmp.eq.s32.totalorder %s19, 3
    %p105 = por %p103, %p104
    %p107 = scmp.ne.s32.totalorder %s92, %s106
    %p108 = scmp.eq.s32.totalorder %s19, 0
    %p109 = por %p107, %p108
    %s111 = sadd.s32 %s110, 1
    %p114 = scmp.eq.s32.totalorder %s13, 3
    %p115 = scmp.ne.s32.totalorder %s110, %s112
    %p116 = scmp.eq.s32.totalorder %s13, 0
    %p117 = por %p115, %p116
    %p118 = scmp.ne.s32.totalorder %s110, %s112
    %p119 = scmp.eq.s32.totalorder %s18, 3
    %p120 = por %p118, %p119
    %p121 = scmp.ne.s32.totalorder %s112, %s113
    %p122 = scmp.eq.s32.totalorder %s18, 0
    %p123 = por %p121, %p122
    %p124 = scmp.ne.s32.totalorder %s112, %s113
    %p125 = scmp.eq.s32.totalorder %s19, 3
    %p126 = por %p124, %p125
    %p128 = scmp.ne.s32.totalorder %s113, %s127
    %p129 = scmp.eq.s32.totalorder %s19, 0
    %p130 = por %p128, %p129
    %s132 = sadd.s32 %s131, 1
    %p135 = scmp.eq.s32.totalorder %s13, 3
    %p136 = scmp.ne.s32.totalorder %s131, %s133
    %p137 = scmp.eq.s32.totalorder %s13, 0
    %p138 = por %p136, %p137
    %p139 = scmp.ne.s32.totalorder %s131, %s133
    %p140 = scmp.eq.s32.totalorder %s18, 3
    %p141 = por %p139, %p140
    %p142 = scmp.ne.s32.totalorder %s133, %s134
    %p143 = scmp.eq.s32.totalorder %s18, 0
    %p144 = por %p142, %p143
    %p145 = scmp.ne.s32.totalorder %s133, %s134
    %p146 = scmp.eq.s32.totalorder %s19, 3
    %p147 = por %p145, %p146
    %p149 = scmp.ne.s32.totalorder %s134, %s148
    %p150 = scmp.eq.s32.totalorder %s19, 0
    %p151 = por %p149, %p150
    %s153 = sadd.s32 %s152, 1
    %p156 = scmp.eq.s32.totalorder %s13, 3
    %p157 = scmp.ne.s32.totalorder %s152, %s154
    %p158 = scmp.eq.s32.totalorder %s13, 0
    %p159 = por %p157, %p158
    %p160 = scmp.ne.s32.totalorder %s152, %s154
    %p161 = scmp.eq.s32.totalorder %s18, 3
    %p162 = por %p160, %p161
    %p163 = scmp.ne.s32.totalorder %s154, %s155
    %p164 = scmp.eq.s32.totalorder %s18, 0
    %p165 = por %p163, %p164
    %p166 = scmp.ne.s32.totalorder %s154, %s155
    %p167 = scmp.eq.s32.totalorder %s19, 3
    %p168 = por %p166, %p167
    %p170 = scmp.ne.s32.totalorder %s155, %s169
    %p171 = scmp.eq.s32.totalorder %s19, 0
    %p172 = por %p170, %p171
    %s173 = ssub.s32 %s13, %s20
    %p174 = scmp.eq.s32.totalorder %s173, 0
    %s176 = sadd.s32 %s175, 1
    %s177 = scalar_select %p174, %s175, %s176
    %p180 = pneg %p174
    %p181 = scmp.eq.s32.totalorder %s13, 3
    %p182 = por %p180, %p181
    %p183 = scmp.ne.s32.totalorder %s175, %s178
    %p184 = scmp.eq.s32.totalorder %s13, 0
    %p185 = por %p183, %p184
    %p186 = scmp.ne.s32.totalorder %s175, %s178
    %p187 = scmp.eq.s32.totalorder %s18, 3
    %p188 = por %p186, %p187
    %p189 = scmp.ne.s32.totalorder %s178, %s179
    %p190 = scmp.eq.s32.totalorder %s18, 0
    %p191 = por %p189, %p190
    %p192 = scmp.ne.s32.totalorder %s178, %s179
    %p193 = scmp.eq.s32.totalorder %s19, 3
    %p194 = por %p192, %p193
    %p196 = scmp.ne.s32.totalorder %s179, %s195
    %p197 = scmp.eq.s32.totalorder %s19, 0
    %p198 = por %p196, %p197
    %p199 = scmp.le.s32.totalorder 1, %s13
    %p200 = scmp.lt.s32.totalorder %s13, 5
    %p201 = pnand %p199, %p200
    %p202 = pneg %p201
    // Predicated region
    $region9: #{umlp_forward.1} parent=5 // pred_check
      _
    $region10: #{umlp_forward.1} parent=5 // pred_check_branch
      %204 = sbr.rel (%p201) target = $region12
    $region11: #{umlp_forward.1} parent=5 // pred_region
      %s205 = ssub.s32 %s13, 1
      // Predicated region
      $region13: #{umlp_forward.1} parent=11 // pred_check
        %p206 = pneg %p60
      $region14: #{umlp_forward.1} parent=11 // pred_check_branch
        %208 = sbr.rel (%p206) target = $region16
      $region15: #{umlp_forward.1} parent=11 // pred_region
        _
      $region16: #{umlp_forward.1} parent=11 // pred_fallthru
        _
      // Predicated region
      $region17: #{umlp_forward.1} parent=11 // pred_check
        %p209 = pneg %p81
      $region18: #{umlp_forward.1} parent=11 // pred_check_branch
        %211 = sbr.rel (%p209) target = $region20
      $region19: #{umlp_forward.1} parent=11 // pred_region
        _
      $region20: #{umlp_forward.1} parent=11 // pred_fallthru
        _
      // Predicated region
      $region21: #{umlp_forward.1} parent=11 // pred_check
        %p212 = pneg %p102
      $region22: #{umlp_forward.1} parent=11 // pred_check_branch
        %214 = sbr.rel (%p212) target = $region24
      $region23: #{umlp_forward.1} parent=11 // pred_region
        _
      $region24: #{umlp_forward.1} parent=11 // pred_fallthru
        _
      // Predicated region
      $region25: #{umlp_forward.1} parent=11 // pred_check
        %p215 = pneg %p123
      $region26: #{umlp_forward.1} parent=11 // pred_check_branch
        %217 = sbr.rel (%p215) target = $region28
      $region27: #{umlp_forward.1} parent=11 // pred_region
        _
      $region28: #{umlp_forward.1} parent=11 // pred_fallthru
        _
      // Predicated region
      $region29: #{umlp_forward.1} parent=11 // pred_check
        %p218 = pneg %p144
      $region30: #{umlp_forward.1} parent=11 // pred_check_branch
        %220 = sbr.rel (%p218) target = $region32
      $region31: #{umlp_forward.1} parent=11 // pred_region
        _
      $region32: #{umlp_forward.1} parent=11 // pred_fallthru
        _
      // Predicated region
      $region33: #{umlp_forward.1} parent=11 // pred_check
        %p221 = pneg %p165
      $region34: #{umlp_forward.1} parent=11 // pred_check_branch
        %223 = sbr.rel (%p221) target = $region36
      $region35: #{umlp_forward.1} parent=11 // pred_region
        _
      $region36: #{umlp_forward.1} parent=11 // pred_fallthru
        _
    $region12: #{umlp_forward.1} parent=5 // pred_fallthru
      _
    %p224 = scmp.lt.s32.totalorder %s13, 4
    // Predicated region
    $region37: #{umlp_forward.1} parent=5 // pred_check
      %p225 = pneg %p224
    $region38: #{umlp_forward.1} parent=5 // pred_check_branch
      %227 = sbr.rel (%p225) target = $region40
    $region39: #{umlp_forward.1} parent=5 // pred_region
      // Predicated region
      $region41: #{umlp_forward.1} parent=39 // pred_check
        %p228 = pneg %p33
      $region42: #{umlp_forward.1} parent=39 // pred_check_branch
        %230 = sbr.rel (%p228) target = $region44
      $region43: #{umlp_forward.1} parent=39 // pred_region
        %s231 = smul.u32 4, %s13
        %p232 = scmp.lt.s32.totalorder %s231, 15
        %s233 = scalar_select %p232, %s231, 15
        %s234 = smul.addr %s233, 8
        %s235 = scalar_lea.vmem %s0, %s234
        %s236 = smul.u32 4, %s13
      $region44: #{umlp_forward.1} parent=39 // pred_fallthru
        _
    $region40: #{umlp_forward.1} parent=5 // pred_fallthru
      _
    %p237 = scmp.le.s32.totalorder 1, %s13
    %p238 = scmp.lt.s32.totalorder %s13, 5
    %p239 = pnand %p237, %p238
    %p240 = pneg %p239
    // Predicated region
    $region45: #{umlp_forward.1} parent=5 // pred_check
      _
    $region46: #{umlp_forward.1} parent=5 // pred_check_branch
      %242 = sbr.rel (%p239) target = $region48
    $region47: #{umlp_forward.1} parent=5 // pred_region
      %s243 = ssub.s32 %s13, 1
      %s244 = smul.u32 4, %s18
      %p245 = scmp.lt.s32.totalorder %s244, 15
      %s246 = scalar_select %p245, %s244, 15
      %s247 = smul.addr %s246, 8
      %s248 = scalar_lea.vmem %s0, %s247
      %p249 = pneg %p39
      %p250 = pneg %p36
      %p251 = pneg %p60
      %p252 = pneg %p57
      %p253 = pneg %p81
      %p254 = pneg %p78
      %p255 = pneg %p102
      %p256 = pneg %p99
      %p257 = pneg %p123
      %p258 = pneg %p120
      %p259 = pneg %p144
      %p260 = pneg %p141
      %p261 = pneg %p165
      %p262 = pneg %p162
      %p263 = pneg %p191
      %p264 = pneg %p188
      %s265 = smul.u32 4, %s18
      %p266 = scmp.lt.s32.totalorder %s265, 15
      %s267 = scalar_select %p266, %s265, 15
      %s268 = smul.addr %s267, 8
      %s269 = scalar_lea.vmem %s7, %s268
      %s270 = smul.u32 4, %s18
      %p271 = scmp.lt.s32.totalorder %s270, 15
      %s272 = scalar_select %p271, %s270, 15
      %s273 = smul.addr %s272, 8
      %s274 = scalar_lea.vmem %s0, %s273
      %s275 = smul.u32 4, %s18
      %s276 = smul.u32 4, %s18
      %p277 = scmp.lt.s32.totalorder %s276, 15
      %s278 = scalar_select %p277, %s276, 15
      %s279 = smul.addr %s278, 8
      %s280 = scalar_lea.vmem %s7, %s279
      %s281 = smul.u32 4, %s18
      %v283 = vld [vmem:[%s274] sm:$0xff]
      %v284 = vld [vmem:[%s274 + $0x8] sm:$0xff]
      %v285 = vld [vmem:[%s274 + $0x10] sm:$0xff]
      %v286 = vld [vmem:[%s274 + $0x18] sm:$0xff]
      %v287 = vmax.f32 %v283, 0.0
      %v288 = vmax.f32 %v284, 0.0
      %v289 = vmax.f32 %v285, 0.0
      %v290 = vmax.f32 %v286, 0.0
      %v291 = vpack.c.bf16 %v288, %v287
      %v292 = vpack.c.bf16 %v290, %v289
      %v293 = vld [vmem:[%s1] sm:$0xf]
      %v294 = vld [vmem:[%s1 + $0x4] sm:$0xf]
      %v295 = vld [vmem:[%s1 + $0x8] sm:$0xf]
      %v296 = vld [vmem:[%s1 + $0xc] sm:$0xf]
      %v297 = vld [vmem:[%s2] sm:$0x1]
      %v299 = vlaneseq
      %v300 = vshrl.u32 %v299, 7
      %v301 = vsub.s32 0, %v300
      %v302 = vrot.slane %v297, %v301
      %v308 = vunpack.c.l.b16 %v293
      %v309 = vunpack.c.l.b16 %v294
      %v310 = vunpack.c.l.b16 %v295
      %v311 = vunpack.c.l.b16 %v296
      %v312 = vpack.c.b16 %v309, %v308
      %v313 = vpack.c.b16 %v311, %v310
      %vm316 = vcmask 261120
      %v318 = vsel %vm316, %v291, 0
      %v321 = vsel %vm316, %v292, 0
      %323 = vmatprep.subr.bf16.mxu0 0
      %324 = vmatpush1.bf16.msra.mxu0 0
      %325 = vmatprep.subr.bf16.mxu0 0
      %326 = vmatpush1.bf16.msra.mxu0 0
      %327 = vmatprep.subr.bf16.mxu0 0
      %328 = vmatpush1.bf16.msra.mxu0 0
      %329 = vmatprep.subr.bf16.mxu0 0
      %330 = vmatpush1.bf16.msra.mxu0 0
      %331 = vmatprep.subr.bf16.mxu0 0
      %332 = vmatpush1.bf16.msra.mxu0 0
      %333 = vmatprep.subr.bf16.mxu0 0
      %334 = vmatpush1.bf16.msra.mxu0 0
      %335 = vmatprep.subr.bf16.mxu0 0
      %336 = vmatpush1.bf16.msra.mxu0 %v313
      %337 = vmatprep.subr.bf16.mxu0 0
      %338 = vmatpush1.bf16.msra.mxu0 %v312
      %339 = vmatprep.subr.bf16.mxu0 0
      %340 = vmatpush2.bf16.msra.mxu0 0
      %341 = vmatprep.subr.bf16.mxu0 0
      %342 = vmatpush2.bf16.msra.mxu0 0
      %343 = vmatprep.subr.bf16.mxu0 0
      %344 = vmatpush2.bf16.msra.mxu0 0
      %345 = vmatprep.subr.bf16.mxu0 0
      %346 = vmatpush2.bf16.msra.mxu0 0
      %347 = vmatprep.subr.bf16.mxu0 0
      %348 = vmatpush2.bf16.msra.mxu0 0
      %349 = vmatprep.subr.bf16.mxu0 0
      %350 = vmatpush2.bf16.msra.mxu0 0
      %351 = vmatprep.subr.bf16.mxu0 0
      %352 = vmatpush2.bf16.msra.mxu0 0
      %353 = vmatprep.subr.bf16.mxu0 0
      %354 = vmatpush2.bf16.msra.mxu0 0
      %355 = vmatprep.mubr.bf16.mxu0 0
      %356 = vmatmul.mubr.bf16.gmra.mxu0 %v318
      %v357 = vpop.f32.mrf.mxu0
      %v358 = vadd.f32 %v302, %v357
      %v359 = vpop.f32.mrf.mxu0
      %v360 = vpop.f32.mrf.mxu0
      %v361 = vadd.f32 %v302, %v360
      %v362 = vpop.f32.mrf.mxu0
      %363 = vmatprep.mubr.bf16.mxu0 0
      %364 = vmatmul.mubr.bf16.gmra.mxu0 %v321
      %v365 = vpop.f32.mrf.mxu0
      %v366 = vadd.f32 %v302, %v365
      %v367 = vpop.f32.mrf.mxu0
      %v368 = vpop.f32.mrf.mxu0
      %v369 = vadd.f32 %v302, %v368
      %v370 = vpop.f32.mrf.mxu0
      %371 = vdwg.mxu0
      %v372 = vmax.f32 %v358, 0.0
      %v373 = vmax.f32 %v361, 0.0
      %v374 = vmax.f32 %v366, 0.0
      %v375 = vmax.f32 %v369, 0.0
      %v376 = vpack.c.bf16 %v373, %v372
      %v377 = vpack.c.bf16 %v375, %v374
      %v378 = vld [vmem:[%s3] sm:$0xf]
      %v379 = vld [vmem:[%s3 + $0x4] sm:$0xf]
      %v380 = vld [vmem:[%s4] sm:$0x1]
      %v382 = vlaneseq
      %v383 = vshrl.u32 %v382, 7
      %v384 = vsub.s32 0, %v383
      %v385 = vrot.slane %v380, %v384
      %v389 = vunpack.c.l.b16 %v378
      %v390 = vunpack.c.l.b16 %v379
      %v391 = vpack.c.b16 %v390, %v389
      %vm393 = vcmask 130048
      %v395 = vsel %vm393, %v376, 0
      %v398 = vsel %vm393, %v377, 0
      %400 = vmatprep.subr.bf16.mxu0 0
      %401 = vmatpush1.bf16.msra.mxu0 0
      %402 = vmatprep.subr.bf16.mxu0 0
      %403 = vmatpush1.bf16.msra.mxu0 0
      %404 = vmatprep.subr.bf16.mxu0 0
      %405 = vmatpush1.bf16.msra.mxu0 0
      %406 = vmatprep.subr.bf16.mxu0 0
      %407 = vmatpush1.bf16.msra.mxu0 0
      %408 = vmatprep.subr.bf16.mxu0 0
      %409 = vmatpush1.bf16.msra.mxu0 0
      %410 = vmatprep.subr.bf16.mxu0 0
      %411 = vmatpush1.bf16.msra.mxu0 0
      %412 = vmatprep.subr.bf16.mxu0 0
      %413 = vmatpush1.bf16.msra.mxu0 0
      %414 = vmatprep.subr.bf16.mxu0 0
      %415 = vmatpush1.bf16.msra.mxu0 %v391
      %416 = vmatprep.subr.bf16.mxu0 0
      %417 = vmatpush2.bf16.msra.mxu0 0
      %418 = vmatprep.subr.bf16.mxu0 0
      %419 = vmatpush2.bf16.msra.mxu0 0
      %420 = vmatprep.subr.bf16.mxu0 0
      %421 = vmatpush2.bf16.msra.mxu0 0
      %422 = vmatprep.subr.bf16.mxu0 0
      %423 = vmatpush2.bf16.msra.mxu0 0
      %424 = vmatprep.subr.bf16.mxu0 0
      %425 = vmatpush2.bf16.msra.mxu0 0
      %426 = vmatprep.subr.bf16.mxu0 0
      %427 = vmatpush2.bf16.msra.mxu0 0
      %428 = vmatprep.subr.bf16.mxu0 0
      %429 = vmatpush2.bf16.msra.mxu0 0
      %430 = vmatprep.subr.bf16.mxu0 0
      %431 = vmatpush2.bf16.msra.mxu0 0
      %432 = vmatprep.mubr.bf16.mxu0 0
      %433 = vmatmul.mubr.bf16.gmra.mxu0 %v395
      %v434 = vpop.f32.mrf.mxu0
      %v435 = vadd.f32 %v385, %v434
      %v436 = vpop.f32.mrf.mxu0
      %v437 = vpop.f32.mrf.mxu0
      %v438 = vadd.f32 %v385, %v437
      %v439 = vpop.f32.mrf.mxu0
      %440 = vmatprep.mubr.bf16.mxu0 0
      %441 = vmatmul.mubr.bf16.gmra.mxu0 %v398
      %v442 = vpop.f32.mrf.mxu0
      %v443 = vadd.f32 %v385, %v442
      %v444 = vpop.f32.mrf.mxu0
      %v445 = vpop.f32.mrf.mxu0
      %v446 = vadd.f32 %v385, %v445
      %v447 = vpop.f32.mrf.mxu0
      %448 = vdwg.mxu0
      %v449 = vpack.c.bf16 %v438, %v435
      %v450 = vpack.c.bf16 %v446, %v443
      %v451 = vld [vmem:[%s5] sm:$0xf]
      %v452 = vld [vmem:[%s5 + $0x4] sm:$0xf]
      %v453 = vld [vmem:[%s5 + $0x8] sm:$0xf]
      %v454 = vld [vmem:[%s5 + $0xc] sm:$0xf]
      %v455 = vld [vmem:[%s6] sm:$0xff]
      %v456 = vld [vmem:[%s6 + $0x8] sm:$0xff]
      %v457 = vld [vmem:[%s6 + $0x10] sm:$0xff]
      %v458 = vld [vmem:[%s6 + $0x18] sm:$0xff]
      %v460 = vsel %vm316, %v283, 0
      %v463 = vsel %vm316, %v284, 0
      %v466 = vsel %vm316, %v285, 0
      %v469 = vsel %vm316, %v286, 0
      %471 = vmatprep.subr.mxu0 0.0
      %472 = vmatpush1.msra.mxu0 0.0
      %473 = vmatprep.subr.mxu0 0.0
      %474 = vmatpush1.msra.mxu0 0.0
      %475 = vmatprep.subr.mxu0 0.0
      %476 = vmatpush1.msra.mxu0 0.0
      %477 = vmatprep.subr.mxu0 0.0
      %478 = vmatpush1.msra.mxu0 0.0
      %479 = vmatprep.subr.mxu0 0.0
      %480 = vmatpush1.msra.mxu0 0.0
      %481 = vmatprep.subr.mxu0 0.0
      %482 = vmatpush1.msra.mxu0 0.0
      %483 = vmatprep.subr.mxu0 0.0
      %484 = vmatpush1.msra.mxu0 0.0
      %485 = vmatprep.subr.mxu0 0.0
      %486 = vmatpush1.msra.mxu0 0.0
      %487 = vmatprep.subr.mxu0 0.0
      %488 = vmatpush1.msra.mxu0 0.0
      %489 = vmatprep.subr.mxu0 0.0
      %490 = vmatpush1.msra.mxu0 0.0
      %491 = vmatprep.subr.mxu0 0.0
      %492 = vmatpush1.msra.mxu0 0.0
      %493 = vmatprep.subr.mxu0 0.0
      %494 = vmatpush1.msra.mxu0 0.0
      %495 = vmatprep.subr.mxu0 0.0
      %496 = vmatpush1.msra.mxu0 %v458
      %497 = vmatprep.subr.mxu0 0.0
      %498 = vmatpush1.msra.mxu0 %v457
      %499 = vmatprep.subr.mxu0 0.0
      %500 = vmatpush1.msra.mxu0 %v456
      %501 = vmatprep.subr.mxu0 0.0
      %502 = vmatpush1.msra.mxu0 %v455
      %503 = vmatprep.subr.mxu0 0.0
      %504 = vmatpush2.msra.mxu0 0.0
      %505 = vmatprep.subr.mxu0 0.0
      %506 = vmatpush2.msra.mxu0 0.0
      %507 = vmatprep.subr.mxu0 0.0
      %508 = vmatpush2.msra.mxu0 0.0
      %509 = vmatprep.subr.mxu0 0.0
      %510 = vmatpush2.msra.mxu0 0.0
      %511 = vmatprep.subr.mxu0 0.0
      %512 = vmatpush2.msra.mxu0 0.0
      %513 = vmatprep.subr.mxu0 0.0
      %514 = vmatpush2.msra.mxu0 0.0
      %515 = vmatprep.subr.mxu0 0.0
      %516 = vmatpush2.msra.mxu0 0.0
      %517 = vmatprep.subr.mxu0 0.0
      %518 = vmatpush2.msra.mxu0 0.0
      %519 = vmatprep.subr.mxu0 0.0
      %520 = vmatpush2.msra.mxu0 0.0
      %521 = vmatprep.subr.mxu0 0.0
      %522 = vmatpush2.msra.mxu0 0.0
      %523 = vmatprep.subr.mxu0 0.0
      %524 = vmatpush2.msra.mxu0 0.0
      %525 = vmatprep.subr.mxu0 0.0
      %526 = vmatpush2.msra.mxu0 0.0
      %527 = vmatprep.subr.mxu0 0.0
      %528 = vmatpush2.msra.mxu0 0.0
      %529 = vmatprep.subr.mxu0 0.0
      %530 = vmatpush2.msra.mxu0 0.0
      %531 = vmatprep.subr.mxu0 0.0
      %532 = vmatpush2.msra.mxu0 0.0
      %533 = vmatprep.subr.mxu0 0.0
      %534 = vmatpush2.msra.mxu0 0.0
      %535 = vmatprep.mubr.f32.mxu0 0.0
      %536 = vmatmul.mubr.f32.gmra.mxu0 %v460
      %v537 = vpop.f32.mrf.mxu0
      %v538 = vadd.f32 0.0, %v537
      %v539 = vpop.f32.mrf.mxu0
      %540 = vmatprep.mubr.f32.mxu0 0.0
      %541 = vmatmul.mubr.f32.gmra.mxu0 %v463
      %v542 = vpop.f32.mrf.mxu0
      %v543 = vadd.f32 0.0, %v542
      %v544 = vpop.f32.mrf.mxu0
      %545 = vmatprep.mubr.f32.mxu0 0.0
      %546 = vmatmul.mubr.f32.gmra.mxu0 %v466
      %v547 = vpop.f32.mrf.mxu0
      %v548 = vadd.f32 0.0, %v547
      %v549 = vpop.f32.mrf.mxu0
      %550 = vmatprep.mubr.f32.mxu0 0.0
      %551 = vmatmul.mubr.f32.gmra.mxu0 %v469
      %v552 = vpop.f32.mrf.mxu0
      %v553 = vadd.f32 0.0, %v552
      %v554 = vpop.f32.mrf.mxu0
      %555 = vdwg.mxu0
      %v560 = vunpack.c.l.b16 %v451
      %v561 = vunpack.c.l.b16 %v452
      %v562 = vunpack.c.l.b16 %v453
      %v563 = vunpack.c.l.b16 %v454
      %v564 = vpack.c.b16 %v561, %v560
      %v565 = vpack.c.b16 %v563, %v562
      %v569 = vsel %vm316, %v449, 0
      %v572 = vsel %vm316, %v450, 0
      %574 = vmatprep.subr.bf16.mxu0 0
      %575 = vmatpush1.bf16.msra.mxu0 0
      %576 = vmatprep.subr.bf16.mxu0 0
      %577 = vmatpush1.bf16.msra.mxu0 0
      %578 = vmatprep.subr.bf16.mxu0 0
      %579 = vmatpush1.bf16.msra.mxu0 0
      %580 = vmatprep.subr.bf16.mxu0 0
      %581 = vmatpush1.bf16.msra.mxu0 0
      %582 = vmatprep.subr.bf16.mxu0 0
      %583 = vmatpush1.bf16.msra.mxu0 0
      %584 = vmatprep.subr.bf16.mxu0 0
      %585 = vmatpush1.bf16.msra.mxu0 0
      %586 = vmatprep.subr.bf16.mxu0 0
      %587 = vmatpush1.bf16.msra.mxu0 %v565
      %588 = vmatprep.subr.bf16.mxu0 0
      %589 = vmatpush1.bf16.msra.mxu0 %v564
      %590 = vmatprep.subr.bf16.mxu0 0
      %591 = vmatpush2.bf16.msra.mxu0 0
      %592 = vmatprep.subr.bf16.mxu0 0
      %593 = vmatpush2.bf16.msra.mxu0 0
      %594 = vmatprep.subr.bf16.mxu0 0
      %595 = vmatpush2.bf16.msra.mxu0 0
      %596 = vmatprep.subr.bf16.mxu0 0
      %597 = vmatpush2.bf16.msra.mxu0 0
      %598 = vmatprep.subr.bf16.mxu0 0
      %599 = vmatpush2.bf16.msra.mxu0 0
      %600 = vmatprep.subr.bf16.mxu0 0
      %601 = vmatpush2.bf16.msra.mxu0 0
      %602 = vmatprep.subr.bf16.mxu0 0
      %603 = vmatpush2.bf16.msra.mxu0 0
      %604 = vmatprep.subr.bf16.mxu0 0
      %605 = vmatpush2.bf16.msra.mxu0 0
      %606 = vmatprep.mubr.bf16.mxu0 0
      %607 = vmatmul.mubr.bf16.gmra.mxu0 %v569
      %v608 = vpop.f32.mrf.mxu0
      %v609 = vadd.f32 %v538, %v608
      %v610 = vpop.f32.mrf.mxu0
      %v611 = vpop.f32.mrf.mxu0
      %v612 = vadd.f32 %v543, %v611
      %v613 = vpop.f32.mrf.mxu0
      %614 = vmatprep.mubr.bf16.mxu0 0
      %615 = vmatmul.mubr.bf16.gmra.mxu0 %v572
      %v616 = vpop.f32.mrf.mxu0
      %v617 = vadd.f32 %v548, %v616
      %v618 = vpop.f32.mrf.mxu0
      %v619 = vpop.f32.mrf.mxu0
      %v620 = vadd.f32 %v553, %v619
      %v621 = vpop.f32.mrf.mxu0
      %622 = vdwg.mxu0
      %623 = vst [vmem:[%s280] sm:$0xff] %v609
      %624 = vst [vmem:[%s280 + $0x8] sm:$0xff] %v612
      %625 = vst [vmem:[%s280 + $0x10] sm:$0xff] %v617
      %626 = vst [vmem:[%s280 + $0x18] sm:$0xff] %v620
      %s627 = smul.u32 4, %s18
      %p628 = scmp.lt.s32.totalorder %s627, 15
      %s629 = scalar_select %p628, %s627, 15
      %s630 = smul.addr %s629, 8
      %s631 = scalar_lea.vmem %s7, %s630
      // Predicated region
      $region49: #{umlp_forward.1} parent=47 // pred_check
        %p632 = pneg %p188
      $region50: #{umlp_forward.1} parent=47 // pred_check_branch
        %634 = sbr.rel (%p632) target = $region52
      $region51: #{umlp_forward.1} parent=47 // pred_region
        %s635 = smul.u32 4, %s18
      $region52: #{umlp_forward.1} parent=47 // pred_fallthru
        _
    $region48: #{umlp_forward.1} parent=5 // pred_fallthru
      _
    %p636 = scmp.le.s32.totalorder 2, %s13
    // Predicated region
    $region53: #{umlp_forward.1} parent=5 // pred_check
      %p637 = pneg %p636
    $region54: #{umlp_forward.1} parent=5 // pred_check_branch
      %639 = sbr.rel (%p637) target = $region56
    $region55: #{umlp_forward.1} parent=5 // pred_region
      %s640 = ssub.s32 %s13, 2
      // Predicated region
      $region57: #{umlp_forward.1} parent=55 // pred_check
        %p641 = pneg %p194
      $region58: #{umlp_forward.1} parent=55 // pred_check_branch
        %643 = sbr.rel (%p641) target = $region60
      $region59: #{umlp_forward.1} parent=55 // pred_region
        %s644 = smul.u32 4, %s19
        %p645 = scmp.lt.s32.totalorder %s644, 15
        %s646 = scalar_select %p645, %s644, 15
        %s647 = smul.addr %s646, 8
        %s648 = scalar_lea.vmem %s7, %s647
      $region60: #{umlp_forward.1} parent=55 // pred_fallthru
        _
    $region56: #{umlp_forward.1} parent=5 // pred_fallthru
      _
  $region6: #{umlp_forward.1} parent=0 // loop_footer
    %s17 = sadd.s32 1, %s13
  $region7: #{umlp_forward.1} parent=0 // loop_footer_branch
    %12 = sbr.rel target = $region3
  $region8: #{umlp_forward.1} parent=0 // loop_exit
    _

</llo_original>
